<compile_context>
chip_gen: v5e
topology: v5e:2x2
jax: 0.10.0
libtpu: 0.0.40
codegen_flags: <defaults>
</compile_context>

<pallas_src>
import functools

import jax
import jax.numpy as jnp
from jax.experimental import pallas as pl
from jax.experimental.pallas import tpu as pltpu


def _round_up(x, m):
    return (x + m - 1) // m * m


def _patch_embed_kernel(patches_ref, w_ref, add_ref, out_ref):
    # patches_ref: (bt, npad, patch_dim), compute dtype.  Row 0 of each image
    #              is a zero "CLS slot", rows N+1..npad-1 are zero padding.
    # w_ref:       (patch_dim, d_model), compute dtype.
    # add_ref:     (npad, d_model), f32.  Row 0 = cls + pos[0];
    #              rows 1..N = bias + pos[n]; padded rows arbitrary (zero).
    # out_ref:     (bt, npad, d_model), f32 -- full padded tile, one aligned
    #              unmasked store.
    bt, npad, patch_dim = patches_ref.shape
    d_model = w_ref.shape[1]

    # Sublane-aligned collapse (npad % 8 == 0) -> free relayout; one MXU
    # matmul over all rows of the batch tile, f32 accumulation.
    p2d = patches_ref[...].reshape(bt * npad, patch_dim)
    proj = jnp.dot(p2d, w_ref[...], preferred_element_type=jnp.float32)

    out = proj.reshape(bt, npad, d_model) + add_ref[...]  # broadcast over bt
    out_ref[...] = out.astype(out_ref.dtype)


def _vmem_budgets():
    """(block_budget_bytes, vmem_limit_bytes), generation-aware."""
    try:
        cap = pltpu.get_tpu_info().vmem_capacity_bytes
    except Exception:  # not on TPU / API shape changed -> assume 128 MiB
        cap = 128 * 1024 * 1024
    if cap <= 64 * 1024 * 1024:          # v7x: 64 MiB VMEM per TensorCore
        return 11 * 1024 * 1024, 30 * 1024 * 1024
    return 22 * 1024 * 1024, 64 * 1024 * 1024  # v5e / v6e: 128 MiB VMEM


def _pick_batch_tile(batch, npad, patch_dim, d_model, in_bytes, out_bytes,
                     budget_bytes):
    """Largest divisor of `batch` whose per-step blocks (incl. the 2x pipeline
    buffers) stay under budget, capped so the grid has >= 2 steps."""
    # Grid-invariant operands (weight + additive term), counted double-buffered
    # to stay conservative.
    fixed = 2 * (patch_dim * d_model * in_bytes + npad * d_model * 4)
    # Streamed blocks: 2x (double-buffered) patches + 2x output per image.
    per_image = 2 * npad * patch_dim * in_bytes + 2 * npad * d_model * out_bytes
    bt = max(1, min(batch, (budget_bytes - fixed) // max(per_image, 1)))
    if batch >= 2:
        bt = min(bt, batch // 2)   # >= 2 grid steps: 2-TC sharding + pipelining
    bt = max(bt, 1)
    while batch % bt != 0:
        bt -= 1
    return bt


@functools.partial(jax.jit, static_argnames=("patch_size", "compute_dtype"))
def patch_embedding_forward(x, w, b, cls_token, pos_embedding, patch_size,
                            compute_dtype=jnp.bfloat16):
    """x: (B, C, H, W) float32. Returns (B, num_patches + 1, d_model) float32."""
    B, C, H, W = x.shape
    p = patch_size
    num_patches = (H // p) * (W // p)
    patch_dim = p * p * C
    d_model = w.shape[1]
    n1 = num_patches + 1
    npad = _round_up(n1, 8)

    # --- patchify exactly like the torch view/permute/view sequence ---
    patches = x.reshape(B, C, H // p, p, W // p, p)
    patches = jnp.transpose(patches, (0, 2, 4, 3, 5, 1))  # (B, H/p, W/p, p, p, C)
    patches = patches.reshape(B, num_patches, patch_dim)
    # Prepend a zero CLS-slot row and pad the sequence dim to a multiple of 8.
    patches_ext = jnp.pad(patches, ((0, 0), (1, npad - n1), (0, 0)))
    patches_ext = patches_ext.astype(compute_dtype)
    w_c = w.astype(compute_dtype)

    # Fold bias + cls + pos into one additive tensor (tiny, fused by XLA):
    #   addvec[0]   = cls + pos[0]
    #   addvec[1:n] = bias + pos[n]
    pos2d = pos_embedding.reshape(n1, d_model).astype(jnp.float32)
    cls2d = cls_token.reshape(1, d_model).astype(jnp.float32)
    addvec = jnp.concatenate(
        [cls2d, jnp.broadcast_to(b.reshape(1, d_model).astype(jnp.float32),
                                 (num_patches, d_model))],
        axis=0,
    ) + pos2d
    addvec = jnp.pad(addvec, ((0, npad - n1), (0, 0)))

    in_bytes = jnp.dtype(compute_dtype).itemsize
    out_bytes = 4  # f32 output
    block_budget, vmem_limit = _vmem_budgets()
    bt = _pick_batch_tile(B, npad, patch_dim, d_model, in_bytes, out_bytes,
                          block_budget)
    grid = (B // bt,)
    # Note: pipeline_mode=pl.Buffered(3) on the patches spec is worth sweeping
    # once the grid has many steps at real ViT shapes; left at the default 2.

    flops = 2 * B * npad * patch_dim * d_model
    bytes_accessed = (
        B * npad * patch_dim * in_bytes      # patches stream
        + patch_dim * d_model * in_bytes     # weight
        + npad * d_model * 4                 # additive term
        + B * npad * d_model * 4             # padded output
    )

    out_padded = pl.pallas_call(
        _patch_embed_kernel,
        out_shape=jax.ShapeDtypeStruct((B, npad, d_model), jnp.float32),
        grid=grid,
        in_specs=[
            pl.BlockSpec((bt, npad, patch_dim), lambda i: (i, 0, 0)),
            pl.BlockSpec((patch_dim, d_model), lambda i: (0, 0)),
            pl.BlockSpec((npad, d_model), lambda i: (0, 0)),
        ],
        out_specs=pl.BlockSpec((bt, npad, d_model), lambda i: (i, 0, 0)),
        compiler_params=pltpu.CompilerParams(
            dimension_semantics=("parallel",),
            allow_input_fusion=[True, False, False],
            vmem_limit_bytes=vmem_limit,
        ),
        cost_estimate=pl.CostEstimate(
            flops=flops, transcendentals=0, bytes_accessed=bytes_accessed
        ),
    )(patches_ext, w_c, addvec)

    # Padded rows dropped here (free / fusible slice in the wrapper).
    return out_padded[:, :n1, :]


def _reference(x, w, b, cls_token, pos_embedding, patch_size):
    B, C, H, W = x.shape
    p = patch_size
    num_patches = (H // p) * (W // p)
    patches = x.reshape(B, C, H // p, p, W // p, p)
    patches = jnp.transpose(patches, (0, 2, 4, 3, 5, 1)).reshape(B, num_patches, -1)
    proj = patches @ w + b
    cls = jnp.broadcast_to(cls_token, (B, 1, w.shape[1]))
    out = jnp.concatenate([cls, proj], axis=1) + pos_embedding
    return out


if __name__ == "__main__":
    # Small shapes consistent with the module:
    #   batch=2, channels=4, image_size=16, patch_size=4
    #   -> num_patches = 16, patch_dim = 4*4*4 = 64, d_model = 32
    batch = 2
    channels = 4
    image_size = 16
    patch_size = 4
    d_model = 32
    num_patches = (image_size // patch_size) ** 2
    patch_dim = patch_size * patch_size * channels

    key = jax.random.PRNGKey(0)
    kx, kw, kb, kcls, kpos = jax.random.split(key, 5)

    x = jax.random.normal(kx, (batch, channels, image_size, image_size), jnp.float32)
    # nn.Linear(patch_dim, d_model): weight stored here as (patch_dim, d_model)
    w = jax.random.normal(kw, (patch_dim, d_model), jnp.float32) * (patch_dim ** -0.5)
    b = jax.random.normal(kb, (d_model,), jnp.float32) * 0.01
    cls_token = jax.random.normal(kcls, (1, 1, d_model), jnp.float32)
    pos_embedding = jax.random.normal(kpos, (1, num_patches + 1, d_model), jnp.float32)

    ref = _reference(x, w, b, cls_token, pos_embedding, patch_size)

    # Exact-parity path (f32 operands): tight tolerance.
    out_f32 = patch_embedding_forward(x, w, b, cls_token, pos_embedding,
                                      patch_size, compute_dtype=jnp.float32)
    out_f32 = jax.block_until_ready(out_f32)
    assert out_f32.shape == (batch, num_patches + 1, d_model), out_f32.shape
    assert jnp.allclose(out_f32, ref, atol=1e-4, rtol=1e-4), "f32 mismatch vs reference"

    # Production path (bf16 operands, f32 accumulation): bf16-level tolerance.
    out_bf16 = patch_embedding_forward(x, w, b, cls_token, pos_embedding,
                                       patch_size, compute_dtype=jnp.bfloat16)
    out_bf16 = jax.block_until_ready(out_bf16)
    assert out_bf16.shape == (batch, num_patches + 1, d_model), out_bf16.shape
    assert jnp.allclose(out_bf16, ref, atol=5e-2, rtol=5e-2), "bf16 mismatch vs reference"

    print("KERNEL_OK")
</pallas_src>

<mosaic_0001>
module attributes {stable_mosaic.version = 11 : i64} {
  func.func @_patch_embed_kernel(%arg0: i32, %arg1: memref<1x24x64xf32, #tpu.memory_space<vmem>>, %arg2: memref<64x32xf32, #tpu.memory_space<vmem>>, %arg3: memref<24x32xf32, #tpu.memory_space<vmem>>, %arg4: memref<1x24x32xf32, #tpu.memory_space<vmem>>) attributes {dimension_semantics = [#tpu.dimension_semantics<parallel>], iteration_bounds = array<i64: 2>, scalar_prefetch = 0 : i64, scratch_operands = 0 : i64, tpu.core_type = #tpu.core_type<tc>, window_params = [{transform_indices = @transform_0, window_bounds = array<i64: 1, 24, 64>}, {pipeline_mode = #tpu.pipeline_mode<synchronous>, transform_indices = @transform_1, window_bounds = array<i64: 64, 32>}, {pipeline_mode = #tpu.pipeline_mode<synchronous>, transform_indices = @transform_2, window_bounds = array<i64: 24, 32>}, {transform_indices = @transform_3, window_bounds = array<i64: 1, 24, 32>}]} {
    %c0 = arith.constant 0 : index
    %c0_0 = arith.constant 0 : index
    %c0_1 = arith.constant 0 : index
    %0 = vector.load %arg1[%c0, %c0_0, %c0_1] : memref<1x24x64xf32, #tpu.memory_space<vmem>>, vector<1x24x64xf32>
    %1 = vector.shape_cast %0 : vector<1x24x64xf32> to vector<24x64xf32>
    %c0_2 = arith.constant 0 : index
    %c0_3 = arith.constant 0 : index
    %2 = vector.load %arg2[%c0_2, %c0_3] : memref<64x32xf32, #tpu.memory_space<vmem>>, vector<64x32xf32>
    %cst = arith.constant dense<0.000000e+00> : vector<24x32xf32>
    %3 = tpu.matmul %1, %2, %cst {dimension_numbers = #tpu.dot_dimension_numbers<[1], [0], [0], [1], [0, 0, 1, 1], [], []>} : vector<24x64xf32>, vector<64x32xf32>, vector<24x32xf32> -> vector<24x32xf32>
    %4 = vector.shape_cast %3 : vector<24x32xf32> to vector<1x24x32xf32>
    %c0_4 = arith.constant 0 : index
    %c0_5 = arith.constant 0 : index
    %5 = vector.load %arg3[%c0_4, %c0_5] : memref<24x32xf32, #tpu.memory_space<vmem>>, vector<24x32xf32>
    %6 = vector.shape_cast %5 : vector<24x32xf32> to vector<1x24x32xf32>
    %7 = arith.addf %4, %6 : vector<1x24x32xf32>
    %c0_6 = arith.constant 0 : index
    %c0_7 = arith.constant 0 : index
    %c0_8 = arith.constant 0 : index
    %8 = vector.load %arg4[%c0_6, %c0_7, %c0_8] : memref<1x24x32xf32, #tpu.memory_space<vmem>>, vector<1x24x32xf32>
    tpu.vector_store %arg4[%c0_6, %c0_7, %c0_8], %7 {strides = array<i32>} : memref<1x24x32xf32, #tpu.memory_space<vmem>>, vector<1x24x32xf32>,
    return
  }
  func.func @transform_0(%arg0: i32) -> (i32, i32, i32) {
    %c0_i32 = arith.constant 0 : i32
    %c0_i32_0 = arith.constant 0 : i32
    %c0_i32_1 = arith.constant 0 : i32
    return %arg0, %c0_i32, %c0_i32_0 : i32, i32, i32
  }
  func.func @transform_1(%arg0: i32) -> (i32, i32) {
    %c0_i32 = arith.constant 0 : i32
    %c0_i32_0 = arith.constant 0 : i32
    %c0_i32_1 = arith.constant 0 : i32
    return %c0_i32, %c0_i32_0 : i32, i32
  }
  func.func @transform_2(%arg0: i32) -> (i32, i32) {
    %c0_i32 = arith.constant 0 : i32
    %c0_i32_0 = arith.constant 0 : i32
    %c0_i32_1 = arith.constant 0 : i32
    return %c0_i32, %c0_i32_0 : i32, i32
  }
  func.func @transform_3(%arg0: i32) -> (i32, i32, i32) {
    %c0_i32 = arith.constant 0 : i32
    %c0_i32_0 = arith.constant 0 : i32
    %c0_i32_1 = arith.constant 0 : i32
    return %arg0, %c0_i32, %c0_i32_0 : i32, i32, i32
  }
}

</mosaic_0001>

<llo_original>
// kernel: patch_embedding_forward.2
$region0: #{patch_embedding_forward.2}
  #allocation0 [shape = 'u32[]', space=smem, size = 0x4, offset = 0x4, fixed_abs, tag = 'smem constant byte address 0x4 - core index']
  #allocation1 [shape = 'u32[72,128]{1,0:T(1,128)}', space=vmem, size = 0x9000, scoped, tag = 'internal scratch']
  #allocation2 [shape = 'u32[2048]{0}', space=vmem, size = 0x2000, scoped, tag = 'scoped memory for patch_embedding_forward.2']
  #allocation3 [shape = 'u32[2048]{0}', space=vmem, size = 0x2000, scoped, tag = 'scoped memory for patch_embedding_forward.2']
  #allocation4 [shape = 'u32[2048]{0}', space=vmem, size = 0x2000, scoped, tag = 'scoped memory for patch_embedding_forward.2']
  #allocation5 [shape = 'u32[2048]{0}', space=vmem, size = 0x2000, scoped, tag = 'scoped memory for patch_embedding_forward.2']
  #allocation6 [shape = 'u32[2048]{0}', space=vmem, size = 0x2000, scoped, tag = 'scoped memory for patch_embedding_forward.2']
  %s0 = inlined_call_operand.vmem [shape: f32[64,32], index: 0, kind: input, shape index: {}]
  %s1 = inlined_call_operand.vmem [shape: f32[24,32], index: 1, kind: input, shape index: {}]
  %s2 = inlined_call_operand.vmem [shape: f32[2,16,64], index: 2, kind: input, shape index: {}]
  %s3 = inlined_call_operand.<no memory space> [shape: f32[], index: 3, kind: input, shape index: {}]
  %s4 = inlined_call_operand.vmem [shape: f32[2,24,32], index: 4, kind: output, shape index: {}]
  %s5 = sld [smem:[#allocation0]]
  $region45: #{patch_embedding_forward.2} parent=0
    _
  %s7 = ssub.s32 1, %s5
  %s8 = scalar_select 0, %s7, %s5
  %v9 = vstv %s3
  loop: start=0, step=1, limit=4
  $region2: #{patch_embedding_forward.2} parent=0 // loop_pre_header
    _
  $region3: #{patch_embedding_forward.2} parent=0 // loop_header
    %s11 = sphi 0, %s15
    %p12 = scmp.ge.s32.totalorder %s11, 4
    %s21 = sphi 0, %s23
    %s24 = sphi 0, %s21
    %s25 = sphi 0, %s24
    %s41 = sphi 0, %s25
    %s45 = sphi 0, %s45
    %s47 = sphi 0, %s45
    %s48 = sphi 0, %s47
    %s62 = sphi 0, %s48
    %s66 = sphi 0, %s66
    %s68 = sphi 0, %s66
    %s69 = sphi 0, %s68
    %s83 = sphi 0, %s69
    %s89 = sphi 0, %s91
    %s92 = sphi 0, %s89
    %s93 = sphi 0, %s92
    %s109 = sphi 0, %s93
  $region4: #{patch_embedding_forward.2} parent=0 // loop_header_branch
    %14 = sbr.rel (%p12) target = $region8
  $region5: #{patch_embedding_forward.2} parent=0 // loop_body
    %s16 = ssub.s32 %s11, 1
    %s17 = ssub.s32 %s11, 2
    %s18 = sadd.s32 %s11, 1
    %s19 = ssub.s32 %s11, %s18
    %p20 = scmp.eq.s32.totalorder %s19, 0
    %s22 = sadd.s32 %s21, 1
    %s23 = scalar_select %p20, %s21, %s22
    %p26 = pneg %p20
    %p27 = scmp.eq.s32.totalorder %s11, 1
    %p28 = por %p26, %p27
    %p29 = scmp.ne.s32.totalorder %s21, %s24
    %p30 = scmp.eq.s32.totalorder %s11, 0
    %p31 = por %p29, %p30
    %p32 = scmp.ne.s32.totalorder %s21, %s24
    %p33 = scmp.eq.s32.totalorder %s16, 1
    %p34 = por %p32, %p33
    %p35 = scmp.ne.s32.totalorder %s24, %s25
    %p36 = scmp.eq.s32.totalorder %s16, 0
    %p37 = por %p35, %p36
    %p38 = scmp.ne.s32.totalorder %s24, %s25
    %p39 = scmp.eq.s32.totalorder %s17, 1
    %p40 = por %p38, %p39
    %p42 = scmp.ne.s32.totalorder %s25, %s41
    %p43 = scmp.eq.s32.totalorder %s17, 0
    %p44 = por %p42, %p43
    %s46 = sadd.s32 %s45, 1
    %p49 = scmp.eq.s32.totalorder %s11, 1
    %p50 = scmp.ne.s32.totalorder %s45, %s47
    %p51 = scmp.eq.s32.totalorder %s11, 0
    %p52 = por %p50, %p51
    %p53 = scmp.ne.s32.totalorder %s45, %s47
    %p54 = scmp.eq.s32.totalorder %s16, 1
    %p55 = por %p53, %p54
    %p56 = scmp.ne.s32.totalorder %s47, %s48
    %p57 = scmp.eq.s32.totalorder %s16, 0
    %p58 = por %p56, %p57
    %p59 = scmp.ne.s32.totalorder %s47, %s48
    %p60 = scmp.eq.s32.totalorder %s17, 1
    %p61 = por %p59, %p60
    %p63 = scmp.ne.s32.totalorder %s48, %s62
    %p64 = scmp.eq.s32.totalorder %s17, 0
    %p65 = por %p63, %p64
    %s67 = sadd.s32 %s66, 1
    %p70 = scmp.eq.s32.totalorder %s11, 1
    %p71 = scmp.ne.s32.totalorder %s66, %s68
    %p72 = scmp.eq.s32.totalorder %s11, 0
    %p73 = por %p71, %p72
    %p74 = scmp.ne.s32.totalorder %s66, %s68
    %p75 = scmp.eq.s32.totalorder %s16, 1
    %p76 = por %p74, %p75
    %p77 = scmp.ne.s32.totalorder %s68, %s69
    %p78 = scmp.eq.s32.totalorder %s16, 0
    %p79 = por %p77, %p78
    %p80 = scmp.ne.s32.totalorder %s68, %s69
    %p81 = scmp.eq.s32.totalorder %s17, 1
    %p82 = por %p80, %p81
    %p84 = scmp.ne.s32.totalorder %s69, %s83
    %p85 = scmp.eq.s32.totalorder %s17, 0
    %p86 = por %p84, %p85
    %s87 = ssub.s32 %s11, %s18
    %p88 = scmp.eq.s32.totalorder %s87, 0
    %s90 = sadd.s32 %s89, 1
    %s91 = scalar_select %p88, %s89, %s90
    %p94 = pneg %p88
    %p95 = scmp.eq.s32.totalorder %s11, 1
    %p96 = por %p94, %p95
    %p97 = scmp.ne.s32.totalorder %s89, %s92
    %p98 = scmp.eq.s32.totalorder %s11, 0
    %p99 = por %p97, %p98
    %p100 = scmp.ne.s32.totalorder %s89, %s92
    %p101 = scmp.eq.s32.totalorder %s16, 1
    %p102 = por %p100, %p101
    %p103 = scmp.ne.s32.totalorder %s92, %s93
    %p104 = scmp.eq.s32.totalorder %s16, 0
    %p105 = por %p103, %p104
    %p106 = scmp.ne.s32.totalorder %s92, %s93
    %p107 = scmp.eq.s32.totalorder %s17, 1
    %p108 = por %p106, %p107
    %p110 = scmp.ne.s32.totalorder %s93, %s109
    %p111 = scmp.eq.s32.totalorder %s17, 0
    %p112 = por %p110, %p111
    %p113 = scmp.le.s32.totalorder 1, %s11
    %p114 = scmp.lt.s32.totalorder %s11, 3
    %p115 = pnand %p113, %p114
    %p116 = pneg %p115
    // Predicated region
    $region9: #{patch_embedding_forward.2} parent=5 // pred_check
      _
    $region10: #{patch_embedding_forward.2} parent=5 // pred_check_branch
      %118 = sbr.rel (%p115) target = $region12
    $region11: #{patch_embedding_forward.2} parent=5 // pred_region
      %s119 = ssub.s32 %s11, 1
      // Predicated region
      $region13: #{patch_embedding_forward.2} parent=11 // pred_check
        %p120 = pneg %p58
      $region14: #{patch_embedding_forward.2} parent=11 // pred_check_branch
        %122 = sbr.rel (%p120) target = $region16
      $region15: #{patch_embedding_forward.2} parent=11 // pred_region
        _
      $region16: #{patch_embedding_forward.2} parent=11 // pred_fallthru
        _
      // Predicated region
      $region17: #{patch_embedding_forward.2} parent=11 // pred_check
        %p123 = pneg %p79
      $region18: #{patch_embedding_forward.2} parent=11 // pred_check_branch
        %125 = sbr.rel (%p123) target = $region20
      $region19: #{patch_embedding_forward.2} parent=11 // pred_region
        _
      $region20: #{patch_embedding_forward.2} parent=11 // pred_fallthru
        _
    $region12: #{patch_embedding_forward.2} parent=5 // pred_fallthru
      _
    %p126 = scmp.lt.s32.totalorder %s11, 2
    // Predicated region
    $region21: #{patch_embedding_forward.2} parent=5 // pred_check
      %p127 = pneg %p126
    $region22: #{patch_embedding_forward.2} parent=5 // pred_check_branch
      %129 = sbr.rel (%p127) target = $region24
    $region23: #{patch_embedding_forward.2} parent=5 // pred_region
      // Predicated region
      $region25: #{patch_embedding_forward.2} parent=23 // pred_check
        %p130 = pneg %p31
      $region26: #{patch_embedding_forward.2} parent=23 // pred_check_branch
        %132 = sbr.rel (%p130) target = $region28
      $region27: #{patch_embedding_forward.2} parent=23 // pred_region
        %p133 = scmp.lt.s32.totalorder %s11, 1
        %s134 = scalar_select %p133, %s11, 1
        %s135 = smul.addr %s134, 2
        %s136 = sadd.s32 4294967295, %s135
        %s137 = smul.addr %s136, 8
        %s138 = scalar_lea.vmem %s2, %s137
      $region28: #{patch_embedding_forward.2} parent=23 // pred_fallthru
        _
    $region24: #{patch_embedding_forward.2} parent=5 // pred_fallthru
      _
    %p139 = scmp.le.s32.totalorder 1, %s11
    %p140 = scmp.lt.s32.totalorder %s11, 3
    %p141 = pnand %p139, %p140
    %p142 = pneg %p141
    // Predicated region
    $region29: #{patch_embedding_forward.2} parent=5 // pred_check
      _
    $region30: #{patch_embedding_forward.2} parent=5 // pred_check_branch
      %144 = sbr.rel (%p141) target = $region32
    $region31: #{patch_embedding_forward.2} parent=5 // pred_region
      #allocation7 [shape = 'u8[12288]{0}', space=vmem, size = 0x3000, dematerialized = true, scoped, tag = 'FusionAdapter Buffer %fusion.1 = f32[2,24,64]{2,1,0:T(8,128)} fusion(%param_2.1, %param_3), kind=kLoop, calls=%fused_computation.1.clone, metadata={op_name="jit(patch_embedding_forward)/jit(_pad)/pad" stack_frame_id=10}']
      %s145 = ssub.s32 %s11, 1
      %p146 = scmp.lt.s32.totalorder %s16, 1
      %s147 = scalar_select %p146, %s16, 1
      %s148 = smul.addr %s147, 2
      %s149 = sadd.s32 4294967295, %s148
      %s150 = smul.addr %s149, 8
      %s151 = scalar_lea.vmem %s2, %s150
      %p152 = pneg %p37
      %p153 = pneg %p34
      %p154 = pneg %p58
      %p155 = pneg %p55
      %p156 = pneg %p79
      %p157 = pneg %p76
      %p158 = pneg %p105
      %p159 = pneg %p102
      %p160 = scmp.lt.s32.totalorder %s16, 1
      %s161 = scalar_select %p160, %s16, 1
      %s162 = smul.addr %s161, 3
      %s163 = smul.addr %s162, 8
      %s164 = scalar_lea.vmem %s4, %s163
      %p165 = scmp.lt.s32.totalorder %s16, 1
      %s166 = scalar_select %p165, %s16, 1
      %s167 = smul.addr %s166, 2
      %s168 = sadd.s32 4294967295, %s167
      %s169 = smul.addr %s168, 8
      %s170 = scalar_lea.vmem %s2, %s169
      %p171 = scmp.lt.s32.totalorder %s16, 1
      %s172 = scalar_select %p171, %s16, 1
      %s173 = smul.addr %s172, 3
      %s174 = smul.addr %s173, 8
      %s175 = scalar_lea.vmem %s4, %s174
      %s176 = scalar_lea.vmem %s170, 8
      %v177 = vld [vmem:[%s176] sm:$0xff]
      %v178 = vlaneseq
      %v179 = vand.u32 %v178, 127
      %vm181 = vcmp.lt.s32.totalorder %v179, 64
      %v182 = vsel %vm181, %v177, %v9
      %vm183 = vcmask 1046528
      %v184 = vsel %vm183, %v182, %v9
      %v185 = vrot.slane %v184, 7
      %s187 = ssub.s32 256, 1
      %188 = vst [vmem:[#allocation7] sm:%s187] %v185
      %s189 = scalar_lea.vmem %s170, 16
      %v190 = vld [vmem:[%s189] sm:$0xff]
      %v191 = vlaneseq
      %v192 = vand.u32 %v191, 127
      %vm194 = vcmp.lt.s32.totalorder %v192, 64
      %v195 = vsel %vm194, %v190, %v9
      %vm196 = vcmask 1046528
      %v197 = vsel %vm196, %v195, %v182
      %v198 = vrot.slane %v197, 7
      %s199 = scalar_lea.vmem [#allocation7], 8
      %s201 = ssub.s32 256, 1
      %202 = vst [vmem:[%s199] sm:%s201] %v198
      %vm203 = vcmask 1046528
      %v204 = vsel %vm203, %v9, %v195
      %v205 = vrot.slane %v204, 7
      %s206 = scalar_lea.vmem [#allocation7], 16
      %s208 = ssub.s32 256, 1
      %209 = vst [vmem:[%s206] sm:%s208] %v205
      %v210 = vld [vmem:[#allocation7] sm:$0xff]
      %v211 = vld [vmem:[#allocation7 + $0x8] sm:$0xff]
      %v212 = vld [vmem:[#allocation7 + $0x10] sm:$0xff]
      %v213 = vld [vmem:[%s0] sm:$0xff]
      %v214 = vld [vmem:[%s0 + $0x8] sm:$0xff]
      %v215 = vld [vmem:[%s0 + $0x10] sm:$0xff]
      %v216 = vld [vmem:[%s0 + $0x18] sm:$0xff]
      %v217 = vld [vmem:[%s0 + $0x20] sm:$0xff]
      %v218 = vld [vmem:[%s0 + $0x28] sm:$0xff]
      %v219 = vld [vmem:[%s0 + $0x30] sm:$0xff]
      %v220 = vld [vmem:[%s0 + $0x38] sm:$0xff]
      %vm221 = vcmask 523264
      %v223 = vsel %vm221, %v210, 0
      %v226 = vsel %vm221, %v211, 0
      %v229 = vsel %vm221, %v212, 0
      %231 = vmatpush.msra.mxu0 0.0
      %232 = vmatpush.msra.mxu0 0.0
      %233 = vmatpush.msra.mxu0 0.0
      %234 = vmatpush.msra.mxu0 0.0
      %235 = vmatpush.msra.mxu0 0.0
      %236 = vmatpush.msra.mxu0 0.0
      %237 = vmatpush.msra.mxu0 0.0
      %238 = vmatpush.msra.mxu0 0.0
      %239 = vmatpush.msra.mxu0 %v220
      %240 = vmatpush.msra.mxu0 %v219
      %241 = vmatpush.msra.mxu0 %v218
      %242 = vmatpush.msra.mxu0 %v217
      %243 = vmatpush.msra.mxu0 %v216
      %244 = vmatpush.msra.mxu0 %v215
      %245 = vmatpush.msra.mxu0 %v214
      %246 = vmatpush.msra.mxu0 %v213
      %247 = vmatmul.f32.gmra.mxu0 %v223
      %v248 = vpop.f32.mrf.mxu0
      %v249 = vadd.f32 0.0, %v248
      %250 = vmatmul.f32.gmra.mxu0 %v226
      %v251 = vpop.f32.mrf.mxu0
      %v252 = vadd.f32 0.0, %v251
      %253 = vmatmul.f32.gmra.mxu0 %v229
      %v254 = vpop.f32.mrf.mxu0
      %v255 = vadd.f32 0.0, %v254
      %256 = vdwg.mxu0
      %v257 = vld [vmem:[%s1] sm:$0xff]
      %v258 = vld [vmem:[%s1 + $0x8] sm:$0xff]
      %v259 = vld [vmem:[%s1 + $0x10] sm:$0xff]
      %v260 = vadd.f32 %v249, %v257
      %v261 = vadd.f32 %v252, %v258
      %v262 = vadd.f32 %v255, %v259
      %vm263 = vcmask 261120
      %264 = vst.msk [vmem:[%s175] sm:$0xff] %vm263, %v260
      %265 = vst.msk [vmem:[%s175 + $0x8] sm:$0xff] %vm263, %v261
      %266 = vst.msk [vmem:[%s175 + $0x10] sm:$0xff] %vm263, %v262
      %p267 = scmp.lt.s32.totalorder %s16, 1
      %s268 = scalar_select %p267, %s16, 1
      %s269 = smul.addr %s268, 3
      %s270 = smul.addr %s269, 8
      %s271 = scalar_lea.vmem %s4, %s270
      // Predicated region
      $region33: #{patch_embedding_forward.2} parent=31 // pred_check
        %p272 = pneg %p102
      $region34: #{patch_embedding_forward.2} parent=31 // pred_check_branch
        %274 = sbr.rel (%p272) target = $region36
      $region35: #{patch_embedding_forward.2} parent=31 // pred_region
        _
      $region36: #{patch_embedding_forward.2} parent=31 // pred_fallthru
        _
    $region32: #{patch_embedding_forward.2} parent=5 // pred_fallthru
      _
    %p275 = scmp.le.s32.totalorder 2, %s11
    // Predicated region
    $region37: #{patch_embedding_forward.2} parent=5 // pred_check
      %p276 = pneg %p275
    $region38: #{patch_embedding_forward.2} parent=5 // pred_check_branch
      %278 = sbr.rel (%p276) target = $region40
    $region39: #{patch_embedding_forward.2} parent=5 // pred_region
      %s279 = ssub.s32 %s11, 2
      // Predicated region
      $region41: #{patch_embedding_forward.2} parent=39 // pred_check
        %p280 = pneg %p108
      $region42: #{patch_embedding_forward.2} parent=39 // pred_check_branch
        %282 = sbr.rel (%p280) target = $region44
      $region43: #{patch_embedding_forward.2} parent=39 // pred_region
        %p283 = scmp.lt.s32.totalorder %s17, 1
        %s284 = scalar_select %p283, %s17, 1
        %s285 = smul.addr %s284, 3
        %s286 = smul.addr %s285, 8
        %s287 = scalar_lea.vmem %s4, %s286
      $region44: #{patch_embedding_forward.2} parent=39 // pred_fallthru
        _
    $region40: #{patch_embedding_forward.2} parent=5 // pred_fallthru
      _
  $region6: #{patch_embedding_forward.2} parent=0 // loop_footer
    %s15 = sadd.s32 1, %s11
  $region7: #{patch_embedding_forward.2} parent=0 // loop_footer_branch
    %10 = sbr.rel target = $region3
  $region8: #{patch_embedding_forward.2} parent=0 // loop_exit
    _

</llo_original>
